<compile_context>
chip_gen: v7x
topology: tpu7x:2x2x1
jax: 0.10.0
libtpu: 0.0.40
codegen_flags: <defaults>
</compile_context>

<pallas_src>
import functools

import jax
import jax.numpy as jnp
from jax.experimental import pallas as pl
from jax.experimental.pallas import tpu as pltpu

EPS = 1e-6


def _layernorm_block(x, a, b, *, no_norm):
    """torch-style LayerNorm on (TB, S, D): unbiased std, eps added to std."""
    if no_norm:
        return x
    D = x.shape[-1]
    mean = jnp.mean(x, axis=-1, keepdims=True)               # (TB, S, 1)
    xc = x - mean
    var = jnp.sum(xc * xc, axis=-1, keepdims=True) / (D - 1)  # unbiased (ddof=1)
    inv = 1.0 / (jnp.sqrt(var) + EPS)                          # exact recip (tolerance)
    # a/b are (1, D); broadcast hoisted here once per block (no inner loops).
    return a * (xc * inv) + b


def _emb_kernel(x_ref, a_ref, b_ref, w_ref, bias_ref, emb_ref, *, no_norm):
    # x_ref block: (TB, S, D)
    x = x_ref[...]
    normed = _layernorm_block(x, a_ref[...], b_ref[...], no_norm=no_norm)
    # x.squeeze(1).mean(1): with S != 1, squeeze(1) is a no-op -> mean over sequence.
    pooled = jnp.mean(normed, axis=1)                          # (TB, D)
    emb = jnp.dot(pooled, w_ref[...],
                  preferred_element_type=jnp.float32) + bias_ref[...]   # (TB, E)
    emb_ref[...] = emb.astype(emb_ref.dtype)


def _norm_kernel(x_ref, a_ref, b_ref, o_ref, *, no_norm):
    o_ref[...] = _layernorm_block(
        x_ref[...], a_ref[...], b_ref[...], no_norm=no_norm).astype(o_ref.dtype)


def _pick_tb(B, S, D, budget_bytes=4 << 20):
    """Batch rows per block: as big as a modest per-buffer VMEM budget allows
    (conservative vs. v7x's 64 MiB VMEM / 32 MiB default scoped limit)."""
    row_bytes = S * D * 4
    tb = max(1, budget_bytes // max(1, row_bytes))
    if tb >= B:
        return B
    if tb >= 8:
        return (tb // 8) * 8   # keep 2-D (TB, E) output block sublane-aligned
    return min(B, 8)


def encoder_forward(x, a_2, b_2, w_fc=None, b_fc=None, *,
                    use_extra_fc=True, no_norm=False):
    """x: (B, S, D) f32. Returns (B, E) if use_extra_fc else (B, S, D)."""
    B, S, D = x.shape
    a2 = a_2.reshape(1, D)
    b2 = b_2.reshape(1, D)

    tb = _pick_tb(B, S, D)
    grid = (pl.cdiv(B, tb),)
    cparams = pltpu.CompilerParams(dimension_semantics=("parallel",))

    x_spec = pl.BlockSpec((tb, S, D), lambda b: (b, 0, 0))
    vec_spec = pl.BlockSpec((1, D), lambda b: (0, 0))

    if use_extra_fc:
        E = w_fc.shape[1]
        bias = b_fc.reshape(1, E)
        kernel = functools.partial(_emb_kernel, no_norm=no_norm)
        emb = pl.pallas_call(
            kernel,
            out_shape=jax.ShapeDtypeStruct((B, E), jnp.float32),
            grid_spec=pltpu.PrefetchScalarGridSpec(
                num_scalar_prefetch=0,
                grid=grid,
                in_specs=[
                    x_spec,                                   # x
                    vec_spec,                                 # a_2
                    vec_spec,                                 # b_2
                    pl.BlockSpec((D, E), lambda b: (0, 0)),   # fc_out weight (in, out)
                    pl.BlockSpec((1, E), lambda b: (0, 0)),   # fc_out bias
                ],
                out_specs=pl.BlockSpec((tb, E), lambda b: (b, 0)),
            ),
            compiler_params=cparams,
        )(x, a2, b2, w_fc, bias)
        return emb

    if no_norm:
        # TODO(synk): EncoderLayer is identity here, so no_norm + no fc is a passthrough.
        return x

    kernel = functools.partial(_norm_kernel, no_norm=no_norm)
    normed = pl.pallas_call(
        kernel,
        out_shape=jax.ShapeDtypeStruct((B, S, D), jnp.float32),
        grid_spec=pltpu.PrefetchScalarGridSpec(
            num_scalar_prefetch=0,
            grid=grid,
            in_specs=[x_spec, vec_spec, vec_spec],
            out_specs=pl.BlockSpec((tb, S, D), lambda b: (b, 0, 0)),
        ),
        compiler_params=cparams,
    )(x, a2, b2)
    return normed


def _reference(x, a_2, b_2, w_fc, b_fc, use_extra_fc=True, no_norm=False):
    out = x
    if not no_norm:
        mean = out.mean(-1, keepdims=True)
        std = jnp.sqrt(((out - mean) ** 2).sum(-1, keepdims=True) / (out.shape[-1] - 1))
        out = a_2 * (out - mean) / (std + EPS) + b_2
    if use_extra_fc:
        out = out.mean(1) @ w_fc + b_fc
    return out


if __name__ == "__main__":
    B, S, D, E = 2, 8, 320, 32   # d_model=320, d_emb=32

    key = jax.random.PRNGKey(0)
    kx, kw, kb = jax.random.split(key, 3)

    x = jax.random.normal(kx, (B, S, D), dtype=jnp.float32)

    # LayerNorm params: as in module __init__ (ones / zeros).
    a_2 = jnp.ones((D,), dtype=jnp.float32)
    b_2 = jnp.zeros((D,), dtype=jnp.float32)

    # fc_out: nn.Linear(d_model, d_emb); stored (in, out) so y = x @ W + b.
    bound = 1.0 / (D ** 0.5)
    w_fc = jax.random.uniform(kw, (D, E), minval=-bound, maxval=bound,
                              dtype=jnp.float32)
    b_fc = jax.random.uniform(kb, (E,), minval=-bound, maxval=bound,
                              dtype=jnp.float32)

    # use_extra_fc=True path: only the (B, E) embedding is produced.
    out = jax.block_until_ready(
        encoder_forward(x, a_2, b_2, w_fc, b_fc, use_extra_fc=True, no_norm=False))
    ref = _reference(x, a_2, b_2, w_fc, b_fc, use_extra_fc=True, no_norm=False)
    assert out.shape == (B, E)
    assert jnp.allclose(out, ref, atol=1e-4, rtol=1e-4), "mismatch vs reference (fc path)"

    # use_extra_fc=False path: only the normed (B, S, D) tensor is produced.
    normed = jax.block_until_ready(
        encoder_forward(x, a_2, b_2, use_extra_fc=False, no_norm=False))
    ref_n = _reference(x, a_2, b_2, w_fc, b_fc, use_extra_fc=False, no_norm=False)
    assert normed.shape == (B, S, D)
    assert jnp.allclose(normed, ref_n, atol=1e-4, rtol=1e-4), "mismatch vs reference (norm path)"

    # no_norm=True + fc path (norm skipped at trace time inside the kernel).
    out_nn = jax.block_until_ready(
        encoder_forward(x, a_2, b_2, w_fc, b_fc, use_extra_fc=True, no_norm=True))
    ref_nn = _reference(x, a_2, b_2, w_fc, b_fc, use_extra_fc=True, no_norm=True)
    assert jnp.allclose(out_nn, ref_nn, atol=1e-4, rtol=1e-4), "mismatch vs reference (no_norm)"

    print("KERNEL_OK")
</pallas_src>

<mosaic_0001>
module attributes {stable_mosaic.version = 11 : i64} {
  func.func @_emb_kernel(%arg0: i32, %arg1: memref<2x8x320xf32, #tpu.memory_space<vmem>>, %arg2: memref<1x320xf32, #tpu.memory_space<vmem>>, %arg3: memref<1x320xf32, #tpu.memory_space<vmem>>, %arg4: memref<320x32xf32, #tpu.memory_space<vmem>>, %arg5: memref<1x32xf32, #tpu.memory_space<vmem>>, %arg6: memref<2x32xf32, #tpu.memory_space<vmem>>) attributes {dimension_semantics = [#tpu.dimension_semantics<parallel>], iteration_bounds = array<i64: 1>, scalar_prefetch = 0 : i64, scratch_operands = 0 : i64, tpu.core_type = #tpu.core_type<tc>, window_params = [{transform_indices = @transform_0, window_bounds = array<i64: 2, 8, 320>}, {pipeline_mode = #tpu.pipeline_mode<synchronous>, transform_indices = @transform_1, window_bounds = array<i64: 1, 320>}, {pipeline_mode = #tpu.pipeline_mode<synchronous>, transform_indices = @transform_2, window_bounds = array<i64: 1, 320>}, {pipeline_mode = #tpu.pipeline_mode<synchronous>, transform_indices = @transform_3, window_bounds = array<i64: 320, 32>}, {pipeline_mode = #tpu.pipeline_mode<synchronous>, transform_indices = @transform_4, window_bounds = array<i64: 1, 32>}, {transform_indices = @transform_5, window_bounds = array<i64: 2, 32>}]} {
    %c0 = arith.constant 0 : index
    %c0_0 = arith.constant 0 : index
    %c0_1 = arith.constant 0 : index
    %0 = vector.load %arg1[%c0, %c0_0, %c0_1] : memref<2x8x320xf32, #tpu.memory_space<vmem>>, vector<2x8x320xf32>
    %c0_2 = arith.constant 0 : index
    %c0_3 = arith.constant 0 : index
    %1 = vector.load %arg2[%c0_2, %c0_3] : memref<1x320xf32, #tpu.memory_space<vmem>>, vector<1x320xf32>
    %c0_4 = arith.constant 0 : index
    %c0_5 = arith.constant 0 : index
    %2 = vector.load %arg3[%c0_4, %c0_5] : memref<1x320xf32, #tpu.memory_space<vmem>>, vector<1x320xf32>
    %cst = arith.constant dense<0.000000e+00> : vector<2x8xf32>
    %3 = vector.multi_reduction <add>, %0, %cst [2] : vector<2x8x320xf32> to vector<2x8xf32>
    %4 = vector.shape_cast %3 : vector<2x8xf32> to vector<2x8x1xf32>
    %cst_6 = arith.constant 3.200000e+02 : f32
    %5 = vector.broadcast %cst_6 : f32 to vector<2x8x1xf32>
    %6 = arith.divf %4, %5 : vector<2x8x1xf32>
    %7 = vector.broadcast %6 : vector<2x8x1xf32> to vector<2x8x320xf32>
    %8 = arith.subf %0, %7 : vector<2x8x320xf32>
    %9 = arith.mulf %8, %8 : vector<2x8x320xf32>
    %cst_7 = arith.constant dense<0.000000e+00> : vector<2x8xf32>
    %10 = vector.multi_reduction <add>, %9, %cst_7 [2] : vector<2x8x320xf32> to vector<2x8xf32>
    %11 = vector.shape_cast %10 : vector<2x8xf32> to vector<2x8x1xf32>
    %cst_8 = arith.constant 3.190000e+02 : f32
    %12 = vector.broadcast %cst_8 : f32 to vector<2x8x1xf32>
    %13 = arith.divf %11, %12 : vector<2x8x1xf32>
    %14 = math.sqrt %13 : vector<2x8x1xf32>
    %cst_9 = arith.constant 9.99999997E-7 : f32
    %15 = vector.broadcast %cst_9 : f32 to vector<2x8x1xf32>
    %16 = arith.addf %14, %15 : vector<2x8x1xf32>
    %cst_10 = arith.constant 1.000000e+00 : f32
    %17 = vector.broadcast %cst_10 : f32 to vector<2x8x1xf32>
    %18 = arith.divf %17, %16 : vector<2x8x1xf32>
    %19 = vector.broadcast %18 : vector<2x8x1xf32> to vector<2x8x320xf32>
    %20 = arith.mulf %8, %19 : vector<2x8x320xf32>
    %21 = vector.shape_cast %1 : vector<1x320xf32> to vector<1x1x320xf32>
    %22 = vector.broadcast %21 : vector<1x1x320xf32> to vector<2x8x320xf32>
    %23 = arith.mulf %22, %20 : vector<2x8x320xf32>
    %24 = vector.shape_cast %2 : vector<1x320xf32> to vector<1x1x320xf32>
    %25 = vector.broadcast %24 : vector<1x1x320xf32> to vector<2x8x320xf32>
    %26 = arith.addf %23, %25 : vector<2x8x320xf32>
    %cst_11 = arith.constant dense<0.000000e+00> : vector<2x320xf32>
    %27 = vector.multi_reduction <add>, %26, %cst_11 [1] : vector<2x8x320xf32> to vector<2x320xf32>
    %cst_12 = arith.constant 8.000000e+00 : f32
    %28 = vector.broadcast %cst_12 : f32 to vector<2x320xf32>
    %29 = arith.divf %27, %28 : vector<2x320xf32>
    %c0_13 = arith.constant 0 : index
    %c0_14 = arith.constant 0 : index
    %30 = vector.load %arg4[%c0_13, %c0_14] : memref<320x32xf32, #tpu.memory_space<vmem>>, vector<320x32xf32>
    %cst_15 = arith.constant dense<0.000000e+00> : vector<2x32xf32>
    %31 = tpu.matmul %29, %30, %cst_15 {dimension_numbers = #tpu.dot_dimension_numbers<[1], [0], [0], [1], [0, 0, 1, 1], [], []>} : vector<2x320xf32>, vector<320x32xf32>, vector<2x32xf32> -> vector<2x32xf32>
    %c0_16 = arith.constant 0 : index
    %c0_17 = arith.constant 0 : index
    %32 = vector.load %arg5[%c0_16, %c0_17] : memref<1x32xf32, #tpu.memory_space<vmem>>, vector<1x32xf32>
    %33 = vector.broadcast %32 : vector<1x32xf32> to vector<2x32xf32>
    %34 = arith.addf %31, %33 : vector<2x32xf32>
    %c0_18 = arith.constant 0 : index
    %c0_19 = arith.constant 0 : index
    %35 = vector.load %arg6[%c0_18, %c0_19] : memref<2x32xf32, #tpu.memory_space<vmem>>, vector<2x32xf32>
    tpu.vector_store %arg6[%c0_18, %c0_19], %34 {strides = array<i32>} : memref<2x32xf32, #tpu.memory_space<vmem>>, vector<2x32xf32>,
    return
  }
  func.func @transform_0(%arg0: i32) -> (i32, i32, i32) {
    %c0_i32 = arith.constant 0 : i32
    %c0_i32_0 = arith.constant 0 : i32
    %c0_i32_1 = arith.constant 0 : i32
    return %arg0, %c0_i32, %c0_i32_0 : i32, i32, i32
  }
  func.func @transform_1(%arg0: i32) -> (i32, i32) {
    %c0_i32 = arith.constant 0 : i32
    %c0_i32_0 = arith.constant 0 : i32
    %c0_i32_1 = arith.constant 0 : i32
    return %c0_i32, %c0_i32_0 : i32, i32
  }
  func.func @transform_2(%arg0: i32) -> (i32, i32) {
    %c0_i32 = arith.constant 0 : i32
    %c0_i32_0 = arith.constant 0 : i32
    %c0_i32_1 = arith.constant 0 : i32
    return %c0_i32, %c0_i32_0 : i32, i32
  }
  func.func @transform_3(%arg0: i32) -> (i32, i32) {
    %c0_i32 = arith.constant 0 : i32
    %c0_i32_0 = arith.constant 0 : i32
    %c0_i32_1 = arith.constant 0 : i32
    return %c0_i32, %c0_i32_0 : i32, i32
  }
  func.func @transform_4(%arg0: i32) -> (i32, i32) {
    %c0_i32 = arith.constant 0 : i32
    %c0_i32_0 = arith.constant 0 : i32
    %c0_i32_1 = arith.constant 0 : i32
    return %c0_i32, %c0_i32_0 : i32, i32
  }
  func.func @transform_5(%arg0: i32) -> (i32, i32) {
    %c0_i32 = arith.constant 0 : i32
    %c0_i32_0 = arith.constant 0 : i32
    return %arg0, %c0_i32 : i32, i32
  }
}

</mosaic_0001>

<llo_original>
// kernel: tpu_custom_call.1
$region0: #{tpu_custom_call.1}
  #allocation0 [shape = 'u32[]', space=smem, size = 0x4, offset = 0x4, fixed_abs, tag = 'smem constant byte address 0x4 - core index']
  #allocation1 [shape = 'u32[144,128]{1,0:T(1,128)}', space=vmem, size = 0x12000, scoped, tag = 'internal scratch']
  %s0 = inlined_call_operand.vmem [shape: f32[2,8,320], index: 0, kind: input, shape index: {}]
  %s1 = inlined_call_operand.vmem [shape: f32[1,320], index: 1, kind: input, shape index: {}]
  %s2 = inlined_call_operand.vmem [shape: f32[1,320], index: 2, kind: input, shape index: {}]
  %s3 = inlined_call_operand.vmem [shape: f32[320,32], index: 3, kind: input, shape index: {}]
  %s4 = inlined_call_operand.vmem [shape: f32[1,32], index: 4, kind: input, shape index: {}]
  %s5 = inlined_call_operand.hbm [shape: f32[2,32], index: 5, kind: output, shape index: {}]
  %s6 = sld [smem:[#allocation0]]
  $region30: #{tpu_custom_call.1} parent=0
    _
  %s8 = ssub.s32 1, %s6
  %s9 = scalar_select 0, %s8, %s6
  $region1: #{tpu_custom_call.1} parent=0
    #allocation2 [shape = 'u8[1024]{0}', space=vmem, size = 0x400, scoped, tag = 'output window, operand 0, single buffered']
    #allocation3 [shape = 's32[1]{0}', space=sflag, size = 0x4, scoped, tag = 'scoped memory for tpu_custom_call.1']
    %10 = vsyncpa [#allocation3], 0
    // Predicated region
    $region2: #{tpu_custom_call.1} parent=1 // pred_check
      _
    $region3: #{tpu_custom_call.1} parent=1 // pred_check_branch
      %12 = sbr.rel (0) target = $region5
    $region4: #{tpu_custom_call.1} parent=1 // pred_region
      _
    $region5: #{tpu_custom_call.1} parent=1 // pred_fallthru
      _
    // Predicated region
    $region6: #{tpu_custom_call.1} parent=1 // pred_check
      _
    $region7: #{tpu_custom_call.1} parent=1 // pred_check_branch
      %14 = sbr.rel (0) target = $region9
    $region8: #{tpu_custom_call.1} parent=1 // pred_region
      _
    $region9: #{tpu_custom_call.1} parent=1 // pred_fallthru
      _
    // Predicated region
    $region10: #{tpu_custom_call.1} parent=1 // pred_check
      _
    $region11: #{tpu_custom_call.1} parent=1 // pred_check_branch
      %16 = sbr.rel (0) target = $region13
    $region12: #{tpu_custom_call.1} parent=1 // pred_region
      _
    $region13: #{tpu_custom_call.1} parent=1 // pred_fallthru
      _
    // Predicated region
    $region14: #{tpu_custom_call.1} parent=1 // pred_check
      _
    $region15: #{tpu_custom_call.1} parent=1 // pred_check_branch
      %18 = sbr.rel (0) target = $region17
    $region16: #{tpu_custom_call.1} parent=1 // pred_region
      _
    $region17: #{tpu_custom_call.1} parent=1 // pred_fallthru
      _
    // Predicated region
    $region18: #{tpu_custom_call.1} parent=1 // pred_check
      _
    $region19: #{tpu_custom_call.1} parent=1 // pred_check_branch
      %20 = sbr.rel (0) target = $region21
    $region20: #{tpu_custom_call.1} parent=1 // pred_region
      _
    $region21: #{tpu_custom_call.1} parent=1 // pred_fallthru
      _
    %v21 = vld [vmem:[%s0] sm:$0xff]
    %v22 = vld [vmem:[%s0 + $0x8] sm:$0xff]
    %v23 = vld [vmem:[%s0 + $0x10] sm:$0xff]
    %v24 = vld [vmem:[%s0 + $0x18] sm:$0xff]
    %v25 = vld [vmem:[%s0 + $0x20] sm:$0xff]
    %v26 = vld [vmem:[%s0 + $0x28] sm:$0xff]
    %v27 = vld [vmem:[%s1] sm:$0x7]
    %v28 = vld [vmem:[%s2] sm:$0x7]
    %v29 = vadd.f32 %v21, %v22
    %vm30 = vcmask 523264
    %v31 = vsel %vm30, %v23, 0.0
    %v32 = vadd.f32 %v29, %v31
    %33 = vadd.xlane.f32.xlu0 %v32
    %v34 = vpop.xlane.xlu0 %33
    %v35 = vadd.f32 %v24, %v25
    %v36 = vsel %vm30, %v26, 0.0
    %v37 = vadd.f32 %v35, %v36
    %38 = vadd.xlane.f32.xlu0 %v37
    %v39 = vpop.xlane.xlu0 %38
    %v40 = vrcp.pop 320.0
    %v41 = vmul.f32 %v34, %v40
    %v42 = vmul.f32 %v39, %v40
    %v43 = vsub.f32 %v21, %v41
    %v44 = vsub.f32 %v22, %v41
    %v45 = vsub.f32 %v23, %v41
    %v46 = vsub.f32 %v24, %v42
    %v47 = vsub.f32 %v25, %v42
    %v48 = vsub.f32 %v26, %v42
    %v49 = vmul.f32 %v43, %v43
    %v50 = vmul.f32 %v44, %v44
    %v51 = vmul.f32 %v45, %v45
    %v52 = vmul.f32 %v46, %v46
    %v53 = vmul.f32 %v47, %v47
    %v54 = vmul.f32 %v48, %v48
    %v55 = vadd.f32 %v49, %v50
    %v56 = vsel %vm30, %v51, 0.0
    %v57 = vadd.f32 %v55, %v56
    %58 = vadd.xlane.f32.xlu0 %v57
    %v59 = vpop.xlane.xlu0 %58
    %v60 = vadd.f32 %v52, %v53
    %v61 = vsel %vm30, %v54, 0.0
    %v62 = vadd.f32 %v60, %v61
    %63 = vadd.xlane.f32.xlu0 %v62
    %v64 = vpop.xlane.xlu0 %63
    %v65 = vrcp.pop 319.0
    %v66 = vmul.f32 %v59, %v65
    %v67 = vmul.f32 %v64, %v65
    %v68 = vrsqrt.pop %v66
    %v69 = vmul.f32 %v66, %v68
    %vm70 = vcmp.eq.f32.partialorder %v66, inf
    %v71 = vsel %vm70, %v66, %v69
    %vm72 = vcmp.eq.f32.partialorder %v66, 0.0
    %v73 = vand.u32 %v66, 2147483648
    %v74 = vsel %vm72, %v73, %v71
    %v75 = vrsqrt.pop %v67
    %v76 = vmul.f32 %v67, %v75
    %vm77 = vcmp.eq.f32.partialorder %v67, inf
    %v78 = vsel %vm77, %v67, %v76
    %vm79 = vcmp.eq.f32.partialorder %v67, 0.0
    %v80 = vand.u32 %v67, 2147483648
    %v81 = vsel %vm79, %v80, %v78
    %v82 = vadd.f32 %v74, 1e-06
    %v83 = vadd.f32 %v81, 1e-06
    %v84 = vrcp.pop %v82
    %v85 = vmul.f32 1.0, %v84
    %v86 = vrcp.pop %v83
    %v87 = vmul.f32 1.0, %v86
    %v88 = vmul.f32 %v43, %v85
    %v89 = vmul.f32 %v44, %v85
    %v90 = vmul.f32 %v45, %v85
    %v91 = vmul.f32 %v46, %v87
    %v92 = vmul.f32 %v47, %v87
    %v93 = vmul.f32 %v48, %v87
    %v95 = vlaneseq
    %v96 = vshrl.u32 %v95, 7
    %v97 = vsub.s32 0, %v96
    %v98 = vrot.slane %v27, %v97
    %v99 = vlaneseq
    %v100 = vshrl.u32 %v99, 7
    %v101 = vsub.s32 1, %v100
    %v102 = vrot.slane %v27, %v101
    %v103 = vlaneseq
    %v104 = vshrl.u32 %v103, 7
    %v105 = vsub.s32 2, %v104
    %v106 = vrot.slane %v27, %v105
    %v110 = vmul.f32 %v98, %v88
    %v111 = vmul.f32 %v102, %v89
    %v112 = vmul.f32 %v106, %v90
    %v113 = vmul.f32 %v98, %v91
    %v114 = vmul.f32 %v102, %v92
    %v115 = vmul.f32 %v106, %v93
    %v117 = vlaneseq
    %v118 = vshrl.u32 %v117, 7
    %v119 = vsub.s32 0, %v118
    %v120 = vrot.slane %v28, %v119
    %v121 = vlaneseq
    %v122 = vshrl.u32 %v121, 7
    %v123 = vsub.s32 1, %v122
    %v124 = vrot.slane %v28, %v123
    %v125 = vlaneseq
    %v126 = vshrl.u32 %v125, 7
    %v127 = vsub.s32 2, %v126
    %v128 = vrot.slane %v28, %v127
    %v132 = vadd.f32 %v110, %v120
    %v133 = vadd.f32 %v111, %v124
    %v134 = vadd.f32 %v112, %v128
    %v135 = vadd.f32 %v113, %v120
    %v136 = vadd.f32 %v114, %v124
    %v137 = vadd.f32 %v115, %v128
    %v138 = vrot.slane %v132, 4
    %v139 = vadd.f32 %v132, %v138
    %v140 = vrot.slane %v139, 2
    %v141 = vadd.f32 %v139, %v140
    %v142 = vrot.slane %v141, 1
    %v143 = vadd.f32 %v141, %v142
    %v144 = vrot.slane %v133, 4
    %v145 = vadd.f32 %v133, %v144
    %v146 = vrot.slane %v145, 2
    %v147 = vadd.f32 %v145, %v146
    %v148 = vrot.slane %v147, 1
    %v149 = vadd.f32 %v147, %v148
    %v150 = vsel %vm30, %v134, 0.0
    %v151 = vrot.slane %v150, 4
    %v152 = vadd.f32 %v150, %v151
    %v153 = vrot.slane %v152, 2
    %v154 = vadd.f32 %v152, %v153
    %v155 = vrot.slane %v154, 1
    %v156 = vadd.f32 %v154, %v155
    %v157 = vrot.slane %v135, 4
    %v158 = vadd.f32 %v135, %v157
    %v159 = vrot.slane %v158, 2
    %v160 = vadd.f32 %v158, %v159
    %v161 = vrot.slane %v160, 1
    %v162 = vadd.f32 %v160, %v161
    %v163 = vrot.slane %v136, 4
    %v164 = vadd.f32 %v136, %v163
    %v165 = vrot.slane %v164, 2
    %v166 = vadd.f32 %v164, %v165
    %v167 = vrot.slane %v166, 1
    %v168 = vadd.f32 %v166, %v167
    %v169 = vsel %vm30, %v137, 0.0
    %v170 = vrot.slane %v169, 4
    %v171 = vadd.f32 %v169, %v170
    %v172 = vrot.slane %v171, 2
    %v173 = vadd.f32 %v171, %v172
    %v174 = vrot.slane %v173, 1
    %v175 = vadd.f32 %v173, %v174
    %v176 = vrcp.pop 8.0
    %v177 = vmul.f32 %v143, %v176
    %v178 = vmul.f32 %v149, %v176
    %v179 = vmul.f32 %v156, %v176
    %v180 = vmul.f32 %v162, %v176
    %v181 = vmul.f32 %v168, %v176
    %v182 = vmul.f32 %v175, %v176
    %v183 = vld [vmem:[%s3] sm:$0xff]
    %v184 = vld [vmem:[%s3 + $0x8] sm:$0xff]
    %v185 = vld [vmem:[%s3 + $0x10] sm:$0xff]
    %v186 = vld [vmem:[%s3 + $0x18] sm:$0xff]
    %v187 = vld [vmem:[%s3 + $0x20] sm:$0xff]
    %v188 = vld [vmem:[%s3 + $0x28] sm:$0xff]
    %v189 = vld [vmem:[%s3 + $0x30] sm:$0xff]
    %v190 = vld [vmem:[%s3 + $0x38] sm:$0xff]
    %v191 = vld [vmem:[%s3 + $0x40] sm:$0xff]
    %v192 = vld [vmem:[%s3 + $0x48] sm:$0xff]
    %v193 = vld [vmem:[%s3 + $0x50] sm:$0xff]
    %v194 = vld [vmem:[%s3 + $0x58] sm:$0xff]
    %v195 = vld [vmem:[%s3 + $0x60] sm:$0xff]
    %v196 = vld [vmem:[%s3 + $0x68] sm:$0xff]
    %v197 = vld [vmem:[%s3 + $0x70] sm:$0xff]
    %v198 = vld [vmem:[%s3 + $0x78] sm:$0xff]
    %v199 = vld [vmem:[%s3 + $0x80] sm:$0xff]
    %v200 = vld [vmem:[%s3 + $0x88] sm:$0xff]
    %v201 = vld [vmem:[%s3 + $0x90] sm:$0xff]
    %v202 = vld [vmem:[%s3 + $0x98] sm:$0xff]
    %v203 = vld [vmem:[%s3 + $0xa0] sm:$0xff]
    %v204 = vld [vmem:[%s3 + $0xa8] sm:$0xff]
    %v205 = vld [vmem:[%s3 + $0xb0] sm:$0xff]
    %v206 = vld [vmem:[%s3 + $0xb8] sm:$0xff]
    %v207 = vld [vmem:[%s3 + $0xc0] sm:$0xff]
    %v208 = vld [vmem:[%s3 + $0xc8] sm:$0xff]
    %v209 = vld [vmem:[%s3 + $0xd0] sm:$0xff]
    %v210 = vld [vmem:[%s3 + $0xd8] sm:$0xff]
    %v211 = vld [vmem:[%s3 + $0xe0] sm:$0xff]
    %v212 = vld [vmem:[%s3 + $0xe8] sm:$0xff]
    %v213 = vld [vmem:[%s3 + $0xf0] sm:$0xff]
    %v214 = vld [vmem:[%s3 + $0xf8] sm:$0xff]
    %v215 = vld [vmem:[%s3 + $0x100] sm:$0xff]
    %v216 = vld [vmem:[%s3 + $0x108] sm:$0xff]
    %v217 = vld [vmem:[%s3 + $0x110] sm:$0xff]
    %v218 = vld [vmem:[%s3 + $0x118] sm:$0xff]
    %v219 = vld [vmem:[%s3 + $0x120] sm:$0xff]
    %v220 = vld [vmem:[%s3 + $0x128] sm:$0xff]
    %v221 = vld [vmem:[%s3 + $0x130] sm:$0xff]
    %v222 = vld [vmem:[%s3 + $0x138] sm:$0xff]
    %v223 = vld [vmem:[%s4] sm:$0x1]
    %v225 = vlaneseq
    %v226 = vshrl.u32 %v225, 7
    %v227 = vsub.s32 0, %v226
    %v228 = vrot.slane %v223, %v227
    %vm236 = vcmask 1041409
    %v237 = vsel %vm236, %v180, %v177
    %v238 = vsel %vm236, %v181, %v178
    %v239 = vsel %vm236, %v182, %v179
    %v242 = vsel %vm30, %v239, 0
    %244 = vmatprep.subr.mxu0 0.0
    %245 = vmatpush1.msra.mxu0 %v183
    %246 = vmatprep.subr.mxu0 0.0
    %247 = vmatpush1.msra.mxu0 %v184
    %248 = vmatprep.subr.mxu0 0.0
    %249 = vmatpush1.msra.mxu0 %v185
    %250 = vmatprep.subr.mxu0 0.0
    %251 = vmatpush1.msra.mxu0 %v186
    %252 = vmatprep.subr.mxu0 0.0
    %253 = vmatpush1.msra.mxu0 %v187
    %254 = vmatprep.subr.mxu0 0.0
    %255 = vmatpush1.msra.mxu0 %v188
    %256 = vmatprep.subr.mxu0 0.0
    %257 = vmatpush1.msra.mxu0 %v189
    %258 = vmatprep.subr.mxu0 0.0
    %259 = vmatpush1.msra.mxu0 %v190
    %260 = vmatprep.subr.mxu0 0.0
    %261 = vmatpush1.msra.mxu0 %v191
    %262 = vmatprep.subr.mxu0 0.0
    %263 = vmatpush1.msra.mxu0 %v192
    %264 = vmatprep.subr.mxu0 0.0
    %265 = vmatpush1.msra.mxu0 %v193
    %266 = vmatprep.subr.mxu0 0.0
    %267 = vmatpush1.msra.mxu0 %v194
    %268 = vmatprep.subr.mxu0 0.0
    %269 = vmatpush1.msra.mxu0 %v195
    %270 = vmatprep.subr.mxu0 0.0
    %271 = vmatpush1.msra.mxu0 %v196
    %272 = vmatprep.subr.mxu0 0.0
    %273 = vmatpush1.msra.mxu0 %v197
    %274 = vmatprep.subr.mxu0 0.0
    %275 = vmatpush1.msra.mxu0 %v198
    %276 = vmatprep.subr.mxu0 0.0
    %277 = vmatpush1.msra.mxu0 %v199
    %278 = vmatprep.subr.mxu0 0.0
    %279 = vmatpush1.msra.mxu0 %v200
    %280 = vmatprep.subr.mxu0 0.0
    %281 = vmatpush1.msra.mxu0 %v201
    %282 = vmatprep.subr.mxu0 0.0
    %283 = vmatpush1.msra.mxu0 %v202
    %284 = vmatprep.subr.mxu0 0.0
    %285 = vmatpush1.msra.mxu0 %v203
    %286 = vmatprep.subr.mxu0 0.0
    %287 = vmatpush1.msra.mxu0 %v204
    %288 = vmatprep.subr.mxu0 0.0
    %289 = vmatpush1.msra.mxu0 %v205
    %290 = vmatprep.subr.mxu0 0.0
    %291 = vmatpush1.msra.mxu0 %v206
    %292 = vmatprep.subr.mxu0 0.0
    %293 = vmatpush1.msra.mxu0 %v207
    %294 = vmatprep.subr.mxu0 0.0
    %295 = vmatpush1.msra.mxu0 %v208
    %296 = vmatprep.subr.mxu0 0.0
    %297 = vmatpush1.msra.mxu0 %v209
    %298 = vmatprep.subr.mxu0 0.0
    %299 = vmatpush1.msra.mxu0 %v210
    %300 = vmatprep.subr.mxu0 0.0
    %301 = vmatpush1.msra.mxu0 %v211
    %302 = vmatprep.subr.mxu0 0.0
    %303 = vmatpush1.msra.mxu0 %v212
    %304 = vmatprep.subr.mxu0 0.0
    %305 = vmatpush1.msra.mxu0 %v213
    %306 = vmatprep.subr.mxu0 0.0
    %307 = vmatpush1.msra.mxu0 %v214
    %308 = vmatprep.mubr.f32.mxu0 %v238
    %309 = vmatmul.mubr.f32.gmra.mrb[0].mxu0 %v237
    %v310 = vpop.f32.mrb[0].mxu0
    %v311 = vadd.f32 %v228, %v310
    %v312 = vpop.f32.mrb[0].mxu0
    %313 = vdwg.mxu0
    %314 = vmatprep.subr.mxu0 0.0
    %315 = vmatpush1.msra.mxu0 %v215
    %316 = vmatprep.subr.mxu0 0.0
    %317 = vmatpush1.msra.mxu0 %v216
    %318 = vmatprep.subr.mxu0 0.0
    %319 = vmatpush1.msra.mxu0 %v217
    %320 = vmatprep.subr.mxu0 0.0
    %321 = vmatpush1.msra.mxu0 %v218
    %322 = vmatprep.subr.mxu0 0.0
    %323 = vmatpush1.msra.mxu0 %v219
    %324 = vmatprep.subr.mxu0 0.0
    %325 = vmatpush1.msra.mxu0 %v220
    %326 = vmatprep.subr.mxu0 0.0
    %327 = vmatpush1.msra.mxu0 %v221
    %328 = vmatprep.subr.mxu0 0.0
    %329 = vmatpush1.msra.mxu0 %v222
    %330 = vmatprep.subr.mxu0 0.0
    %331 = vmatpush1.msra.mxu0 0.0
    %332 = vmatprep.subr.mxu0 0.0
    %333 = vmatpush1.msra.mxu0 0.0
    %334 = vmatprep.subr.mxu0 0.0
    %335 = vmatpush1.msra.mxu0 0.0
    %336 = vmatprep.subr.mxu0 0.0
    %337 = vmatpush1.msra.mxu0 0.0
    %338 = vmatprep.subr.mxu0 0.0
    %339 = vmatpush1.msra.mxu0 0.0
    %340 = vmatprep.subr.mxu0 0.0
    %341 = vmatpush1.msra.mxu0 0.0
    %342 = vmatprep.subr.mxu0 0.0
    %343 = vmatpush1.msra.mxu0 0.0
    %344 = vmatprep.subr.mxu0 0.0
    %345 = vmatpush1.msra.mxu0 0.0
    %346 = vmatprep.subr.mxu0 0.0
    %347 = vmatpush1.msra.mxu0 0.0
    %348 = vmatprep.subr.mxu0 0.0
    %349 = vmatpush1.msra.mxu0 0.0
    %350 = vmatprep.subr.mxu0 0.0
    %351 = vmatpush1.msra.mxu0 0.0
    %352 = vmatprep.subr.mxu0 0.0
    %353 = vmatpush1.msra.mxu0 0.0
    %354 = vmatprep.subr.mxu0 0.0
    %355 = vmatpush1.msra.mxu0 0.0
    %356 = vmatprep.subr.mxu0 0.0
    %357 = vmatpush1.msra.mxu0 0.0
    %358 = vmatprep.subr.mxu0 0.0
    %359 = vmatpush1.msra.mxu0 0.0
    %360 = vmatprep.subr.mxu0 0.0
    %361 = vmatpush1.msra.mxu0 0.0
    %362 = vmatprep.subr.mxu0 0.0
    %363 = vmatpush1.msra.mxu0 0.0
    %364 = vmatprep.subr.mxu0 0.0
    %365 = vmatpush1.msra.mxu0 0.0
    %366 = vmatprep.subr.mxu0 0.0
    %367 = vmatpush1.msra.mxu0 0.0
    %368 = vmatprep.subr.mxu0 0.0
    %369 = vmatpush1.msra.mxu0 0.0
    %370 = vmatprep.subr.mxu0 0.0
    %371 = vmatpush1.msra.mxu0 0.0
    %372 = vmatprep.subr.mxu0 0.0
    %373 = vmatpush1.msra.mxu0 0.0
    %374 = vmatprep.subr.mxu0 0.0
    %375 = vmatpush1.msra.mxu0 0.0
    %376 = vmatprep.subr.mxu0 0.0
    %377 = vmatpush1.msra.mxu0 0.0
    %378 = vmatprep.mubr.f32.mxu0 0.0
    %379 = vmatmul.mubr.f32.gmra.mrb[0].mxu0 %v242
    %v380 = vpop.f32.mrb[0].mxu0
    %v381 = vadd.f32 %v311, %v380
    %v382 = vpop.f32.mrb[0].mxu0
    %383 = vdwg.mxu0
    %vm384 = vcmask 254976
    %385 = vst.msk [vmem:[#allocation2] sm:$0x3] %vm384, %v381
    // Predicated region
    $region22: #{tpu_custom_call.1} parent=1 // pred_check
      _
    $region23: #{tpu_custom_call.1} parent=1 // pred_check_branch
      %387 = sbr.rel (0) target = $region25
    $region24: #{tpu_custom_call.1} parent=1 // pred_region
      %s389 = ssub.s32 32, 32
      %390 = vsyncadd [#allocation3], %s389
      %s392 = sshll.u32 [#allocation2], 4
      %s393 = int_to_ptr.vmem [resolvable:$true] %s392
      %395 = dma.vmem_to_hbm [thread:$0]  %s393, 32, %s5, [#allocation3]
    $region25: #{tpu_custom_call.1} parent=1 // pred_fallthru
      _
    // Predicated region
    $region26: #{tpu_custom_call.1} parent=1 // pred_check
      _
    $region27: #{tpu_custom_call.1} parent=1 // pred_check_branch
      %397 = sbr.rel (0) target = $region29
    $region28: #{tpu_custom_call.1} parent=1 // pred_region
      %398 = dma.done [#allocation3], 32
    $region29: #{tpu_custom_call.1} parent=1 // pred_fallthru
      _
    %399 = vsyncpa [#allocation3], 1

</llo_original>
